<compile_context>
chip_gen: v6e
topology: v6e:2x2x1
jax: 0.10.0
libtpu: 0.0.40
codegen_flags: <defaults>
</compile_context>

<pallas_src>
import math
import inspect
from functools import partial

import jax
import jax.numpy as jnp
from jax.experimental import pallas as pl
from jax.experimental.pallas import tpu as pltpu


# ---------------------------------------------------------------------------
# Helpers
# ---------------------------------------------------------------------------
def _round_up(x, m):
    return ((x + m - 1) // m) * m


def _pad2d(a, rows, cols):
    r, c = a.shape
    if r == rows and c == cols:
        return a
    return jnp.pad(a, ((0, rows - r), (0, cols - c)))


# Single-buffering support for resident (constant index_map) operands.
try:
    _HAS_BUFFERED = hasattr(pl, "Buffered") and (
        "pipeline_mode" in inspect.signature(pl.BlockSpec).parameters
    )
except Exception:  # pragma: no cover
    _HAS_BUFFERED = hasattr(pl, "Buffered")
_RESIDENT_BUFS = 1 if _HAS_BUFFERED else 2


# Generation-aware VMEM budget (v5e/v6e: 128 MiB, v7x: 64 MiB per TC).
def _detect_vmem_capacity():
    try:
        info = pltpu.get_tpu_info()
        for attr in ("vmem_capacity_bytes", "vmem_size_bytes", "vmem_bytes"):
            v = getattr(info, attr, None)
            if v:
                return int(v)
    except Exception:
        pass
    return 64 * 1024 * 1024  # conservative default (v7x per-TC)


_VMEM_CACHE = None


def _vmem_budget_limit():
    global _VMEM_CACHE
    if _VMEM_CACHE is None:
        cap = _detect_vmem_capacity()
        budget = int(cap * 0.70)
        limit = min(int(cap * 0.85), 112 * 1024 * 1024)
        _VMEM_CACHE = (budget, limit)
    return _VMEM_CACHE


# ---------------------------------------------------------------------------
# Kernel 1: row-streamed matmul with the RHS resident in VMEM.
#   a (streamed, any dtype, cast to bf16 in-kernel)  @  b (resident, bf16)
#   -> f32 accumulation on the MXU, optional bias add, cast to out dtype.
# The contraction dim is taken at its natural (possibly non-128) extent, so
# `a` (e.g. the N x N adjacency) never needs to be padded or copied in HBM.
# ---------------------------------------------------------------------------
def _resident_matmul_kernel(a_ref, b_ref, o_ref):
    a = a_ref[...].astype(jnp.bfloat16)
    o_ref[...] = jnp.dot(
        a, b_ref[...], preferred_element_type=jnp.float32
    ).astype(o_ref.dtype)


def _resident_matmul_bias_kernel(a_ref, b_ref, bias_ref, o_ref):
    a = a_ref[...].astype(jnp.bfloat16)
    acc = jnp.dot(a, b_ref[...], preferred_element_type=jnp.float32)
    o_ref[...] = (acc + bias_ref[...]).astype(o_ref.dtype)


def matmul_resident_rhs(a, b_p, bias_p=None, *, out_dtype=jnp.float32,
                        row_tile=256, vmem_limit=None):
    m, k = a.shape
    k2, n_pad = b_p.shape
    assert k == k2 and n_pad % 128 == 0
    b_p = b_p.astype(jnp.bfloat16)

    tm = min(row_tile, _round_up(m, 8))
    grid = ((m + tm - 1) // tm,)

    flops = int(2 * m * k * n_pad)
    bytes_accessed = int(a.size * a.dtype.itemsize + b_p.size * 2
                         + m * n_pad * jnp.dtype(out_dtype).itemsize)

    def build(single_buffer):
        def res_spec(shape):
            if single_buffer:
                return pl.BlockSpec(shape, lambda i: (0, 0),
                                    pipeline_mode=pl.Buffered(1))
            return pl.BlockSpec(shape, lambda i: (0, 0))

        in_specs = [pl.BlockSpec((tm, k), lambda i: (i, 0)),   # streamed rows
                    res_spec((k, n_pad))]                      # resident RHS
        kernel = _resident_matmul_kernel
        if bias_p is not None:
            in_specs.append(res_spec((1, n_pad)))              # resident bias
            kernel = _resident_matmul_bias_kernel

        cparams = dict(dimension_semantics=("parallel",))      # both TCs on v7x
        if vmem_limit is not None:
            cparams["vmem_limit_bytes"] = int(vmem_limit)

        return pl.pallas_call(
            kernel,
            out_shape=jax.ShapeDtypeStruct((m, n_pad), out_dtype),
            grid_spec=pltpu.PrefetchScalarGridSpec(
                num_scalar_prefetch=0,
                grid=grid,
                in_specs=in_specs,
                out_specs=pl.BlockSpec((tm, n_pad), lambda i: (i, 0)),
            ),
            compiler_params=pltpu.CompilerParams(**cparams),
            cost_estimate=pl.CostEstimate(flops=flops, transcendentals=0,
                                          bytes_accessed=bytes_accessed),
        )

    args = [a, b_p] + ([bias_p] if bias_p is not None else [])
    if _HAS_BUFFERED:
        try:
            return build(True)(*args)
        except Exception:
            pass  # retry with default double-buffering
    return build(False)(*args)


# ---------------------------------------------------------------------------
# Kernel 2: generic tiled matmul (+ optional bias) for very large operands.
# `a` is streamed unpadded; the ragged contraction tail is masked in-kernel
# (iota compare + where), the small RHS / bias are zero-padded. Accumulates
# into the resident output block (reduction axis last, "arbitrary").
# ---------------------------------------------------------------------------
def _tiled_matmul_kernel(a_ref, b_ref, o_ref, *, k_total, tk):
    kk = pl.program_id(2)

    @pl.when(kk == 0)
    def _init():
        o_ref[...] = jnp.zeros_like(o_ref)

    a = a_ref[...]
    rem = k_total - kk * tk                                   # ragged k tail
    col = jax.lax.broadcasted_iota(jnp.int32, a.shape, 1)
    a = jnp.where(col < rem, a, 0).astype(jnp.bfloat16)
    o_ref[...] = (o_ref[...] + jnp.dot(
        a, b_ref[...], preferred_element_type=jnp.float32)).astype(o_ref.dtype)


def _tiled_matmul_bias_kernel(a_ref, b_ref, bias_ref, o_ref, *, k_total, tk):
    kk = pl.program_id(2)

    @pl.when(kk == 0)
    def _init():
        o_ref[...] = jnp.zeros_like(o_ref)

    a = a_ref[...]
    rem = k_total - kk * tk
    col = jax.lax.broadcasted_iota(jnp.int32, a.shape, 1)
    a = jnp.where(col < rem, a, 0).astype(jnp.bfloat16)
    o_ref[...] = (o_ref[...] + jnp.dot(
        a, b_ref[...], preferred_element_type=jnp.float32)).astype(o_ref.dtype)

    @pl.when(kk == pl.num_programs(2) - 1)
    def _fin():
        o_ref[...] = (o_ref[...] + bias_ref[...]).astype(o_ref.dtype)


def pallas_matmul(a, b, bias=None, *, out_dtype=jnp.float32,
                  tm=512, tn=512, tk=512, vmem_limit=None):
    m, k = a.shape
    k2, n = b.shape
    assert k == k2

    tm = min(tm, _round_up(m, 8))
    tn = min(tn, _round_up(n, 128))
    tk = min(tk, _round_up(k, 128))
    n_pad = _round_up(n, tn)
    k_pad = _round_up(k, tk)

    b_p = _pad2d(b, k_pad, n_pad).astype(jnp.bfloat16)        # small operand
    grid = ((m + tm - 1) // tm, n_pad // tn, k_pad // tk)

    in_specs = [pl.BlockSpec((tm, tk), lambda i, j, kk: (i, kk)),
                pl.BlockSpec((tk, tn), lambda i, j, kk: (kk, j))]
    args = [a, b_p]
    if bias is not None:
        bias_p = _pad2d(jnp.asarray(bias, jnp.float32).reshape(1, n), 1, n_pad)
        in_specs.append(pl.BlockSpec((1, tn), lambda i, j, kk: (0, j)))
        args.append(bias_p)
        kernel = partial(_tiled_matmul_bias_kernel, k_total=k, tk=tk)
    else:
        kernel = partial(_tiled_matmul_kernel, k_total=k, tk=tk)

    flops = int(2 * m * k * n)
    bytes_accessed = int(a.size * a.dtype.itemsize + b_p.size * 2
                         + m * n_pad * jnp.dtype(out_dtype).itemsize)
    cparams = dict(dimension_semantics=("parallel", "parallel", "arbitrary"))
    if vmem_limit is not None:
        cparams["vmem_limit_bytes"] = int(vmem_limit)

    out = pl.pallas_call(
        kernel,
        out_shape=jax.ShapeDtypeStruct((m, n_pad), out_dtype),
        grid_spec=pltpu.PrefetchScalarGridSpec(
            num_scalar_prefetch=0,
            grid=grid,
            in_specs=in_specs,
            out_specs=pl.BlockSpec((tm, tn), lambda i, j, kk: (i, j)),
        ),
        compiler_params=pltpu.CompilerParams(**cparams),
        cost_estimate=pl.CostEstimate(flops=flops, transcendentals=0,
                                      bytes_accessed=bytes_accessed),
    )(*args)
    return out[:, :n]


# ---------------------------------------------------------------------------
# Path selection: resident-RHS kernel (biggest row tile that fits the
# generation-aware VMEM budget), otherwise the generic tiled fallback.
# ---------------------------------------------------------------------------
_RESIDENT_ROW_TILES = (512, 256, 128, 64, 32, 16, 8)


def _auto_matmul(a, b_p, bias_p=None, *, out_dtype=jnp.float32, budget, limit):
    m, k = a.shape
    n_pad = b_p.shape[1]
    a_bytes = jnp.dtype(a.dtype).itemsize
    o_bytes = jnp.dtype(out_dtype).itemsize
    resident = _RESIDENT_BUFS * (k * n_pad * 2 + 8 * n_pad * 4)  # bf16 RHS + bias
    for rt in _RESIDENT_ROW_TILES:
        tm = min(rt, _round_up(m, 8))
        est = (resident
               + 2 * tm * k * a_bytes        # streamed `a` tile (double-buffered)
               + tm * k * 2                  # in-kernel bf16 cast temp
               + 2 * tm * n_pad * o_bytes    # output tile (double-buffered)
               + tm * n_pad * 4              # f32 matmul accumulator
               + (2 << 20))                  # slack
        if est <= budget:
            return matmul_resident_rhs(a, b_p, bias_p, out_dtype=out_dtype,
                                       row_tile=tm, vmem_limit=limit)
    return pallas_matmul(a, b_p, bias_p, out_dtype=out_dtype, vmem_limit=limit)


# ---------------------------------------------------------------------------
# GraphConvolution module (forward only)
# ---------------------------------------------------------------------------
class GraphConvolution:
    def __init__(self, in_features, out_features, with_bias=True, key=None):
        self.in_features = in_features
        self.out_features = out_features
        if key is None:
            key = jax.random.PRNGKey(0)
        kw, kb = jax.random.split(key)
        # Matches torch reset_parameters(): uniform(-stdv, stdv), stdv = 1/sqrt(out)
        stdv = 1.0 / math.sqrt(out_features)
        self.weight = jax.random.uniform(
            kw, (in_features, out_features), jnp.float32, -stdv, stdv)
        self.bias = (jax.random.uniform(kb, (out_features,), jnp.float32,
                                        -stdv, stdv) if with_bias else None)

    def __call__(self, x, adj):
        n, fin = x.shape
        assert fin == self.in_features and adj.shape == (n, n)
        budget, limit = _vmem_budget_limit()
        fout_pad = _round_up(self.out_features, 128)

        w_p = _pad2d(self.weight, self.in_features, fout_pad).astype(jnp.bfloat16)
        bias_p = (_pad2d(self.bias.reshape(1, -1).astype(jnp.float32), 1, fout_pad)
                  if self.bias is not None else None)

        # 1) projection: support = X @ W  (bf16, columns pre-padded to 128)
        support = _auto_matmul(x, w_p, None, out_dtype=jnp.bfloat16,
                               budget=budget, limit=limit)
        # 2) aggregation: out = adj @ support (+ bias); adj streamed unpadded
        #    in f32 and cast to bf16 in-kernel; f32 accumulation; row-parallel.
        out = _auto_matmul(adj, support, bias_p, out_dtype=jnp.float32,
                           budget=budget, limit=limit)
        return out[:, :self.out_features]


# ---------------------------------------------------------------------------
# Demo / correctness check
# ---------------------------------------------------------------------------
def _make_graph(key, n, in_f):
    k_x, k_adj = jax.random.split(key)
    x = jax.random.normal(k_x, (n, in_f), jnp.float32)
    raw = jax.random.uniform(k_adj, (n, n), jnp.float32)
    adj = ((raw + raw.T) > 1.6).astype(jnp.float32) + jnp.eye(n, dtype=jnp.float32)
    deg = jnp.sum(adj, axis=1, keepdims=True)
    return x, adj / deg


def _rel_err(out, ref):
    return float(jnp.max(jnp.abs(out - ref)) / (jnp.max(jnp.abs(ref)) + 1e-6))


if __name__ == "__main__":
    key = jax.random.PRNGKey(0)
    k_g1, k_p1, k_g2, k_p2 = jax.random.split(key, 4)
    TOL = 3e-2  # bf16 MXU inputs, f32 accumulation

    # --- aligned case: exercises the resident bf16 path --------------------
    N, IN_F, OUT_F = 256, 128, 128
    x, adj = _make_graph(k_g1, N, IN_F)
    layer = GraphConvolution(IN_F, OUT_F, with_bias=True, key=k_p1)
    out = jax.block_until_ready(layer(x, adj))
    ref = adj @ (x @ layer.weight) + layer.bias
    assert out.shape == (N, OUT_F)
    assert _rel_err(out, ref) < TOL

    # --- ragged shapes: unpadded adj, non-128 feature dims -----------------
    N2, IN2, OUT2 = 200, 72, 50
    x2, adj2 = _make_graph(k_g2, N2, IN2)
    layer2 = GraphConvolution(IN2, OUT2, with_bias=True, key=k_p2)
    ref2 = adj2 @ (x2 @ layer2.weight) + layer2.bias
    out2 = jax.block_until_ready(layer2(x2, adj2))
    assert out2.shape == (N2, OUT2)
    assert _rel_err(out2, ref2) < TOL

    # --- no-bias variant (bias machinery skipped entirely) -----------------
    layer3 = GraphConvolution(IN2, OUT2, with_bias=False, key=k_p2)
    ref3 = adj2 @ (x2 @ layer3.weight)
    out3 = jax.block_until_ready(layer3(x2, adj2))
    assert out3.shape == (N2, OUT2)
    assert _rel_err(out3, ref3) < TOL

    # --- explicit check of the large-graph tiled fallback path -------------
    support2 = x2 @ layer2.weight
    out2_t = jax.block_until_ready(
        pallas_matmul(adj2, support2, layer2.bias.reshape(1, -1),
                      out_dtype=jnp.float32))
    assert out2_t.shape == (N2, OUT2)
    assert _rel_err(out2_t, ref2) < TOL

    print("KERNEL_OK")
</pallas_src>

<mosaic_0001>
module attributes {stable_mosaic.version = 11 : i64} {
  func.func @_resident_matmul_kernel(%arg0: i32, %arg1: memref<256x128xf32, #tpu.memory_space<vmem>>, %arg2: memref<128x128xbf16, #tpu.memory_space<vmem>>, %arg3: memref<256x128xbf16, #tpu.memory_space<vmem>>) attributes {dimension_semantics = [#tpu.dimension_semantics<parallel>], iteration_bounds = array<i64: 1>, scalar_prefetch = 0 : i64, scratch_operands = 0 : i64, tpu.core_type = #tpu.core_type<tc>, window_params = [{transform_indices = @transform_0, window_bounds = array<i64: 256, 128>}, {pipeline_mode = #tpu.pipeline_mode<synchronous>, transform_indices = @transform_1, window_bounds = array<i64: 128, 128>}, {transform_indices = @transform_2, window_bounds = array<i64: 256, 128>}]} {
    %c0 = arith.constant 0 : index
    %c0_0 = arith.constant 0 : index
    %0 = vector.load %arg1[%c0, %c0_0] : memref<256x128xf32, #tpu.memory_space<vmem>>, vector<256x128xf32>
    %1 = arith.truncf %0 : vector<256x128xf32> to vector<256x128xbf16>
    %c0_1 = arith.constant 0 : index
    %c0_2 = arith.constant 0 : index
    %2 = vector.load %arg2[%c0_1, %c0_2] : memref<128x128xbf16, #tpu.memory_space<vmem>>, vector<128x128xbf16>
    %cst = arith.constant dense<0.000000e+00> : vector<256x128xf32>
    %3 = tpu.matmul %1, %2, %cst {dimension_numbers = #tpu.dot_dimension_numbers<[1], [0], [0], [1], [0, 0, 1, 1], [], []>} : vector<256x128xbf16>, vector<128x128xbf16>, vector<256x128xf32> -> vector<256x128xf32>
    %4 = arith.truncf %3 : vector<256x128xf32> to vector<256x128xbf16>
    %c0_3 = arith.constant 0 : index
    %c0_4 = arith.constant 0 : index
    %5 = vector.load %arg3[%c0_3, %c0_4] : memref<256x128xbf16, #tpu.memory_space<vmem>>, vector<256x128xbf16>
    tpu.vector_store %arg3[%c0_3, %c0_4], %4 {strides = array<i32>} : memref<256x128xbf16, #tpu.memory_space<vmem>>, vector<256x128xbf16>,
    return
  }
  func.func @transform_0(%arg0: i32) -> (i32, i32) {
    %c0_i32 = arith.constant 0 : i32
    %c0_i32_0 = arith.constant 0 : i32
    return %arg0, %c0_i32 : i32, i32
  }
  func.func @transform_1(%arg0: i32) -> (i32, i32) {
    %c0_i32 = arith.constant 0 : i32
    %c0_i32_0 = arith.constant 0 : i32
    %c0_i32_1 = arith.constant 0 : i32
    return %c0_i32, %c0_i32_0 : i32, i32
  }
  func.func @transform_2(%arg0: i32) -> (i32, i32) {
    %c0_i32 = arith.constant 0 : i32
    %c0_i32_0 = arith.constant 0 : i32
    return %arg0, %c0_i32 : i32, i32
  }
}

module attributes {stable_mosaic.version = 11 : i64} {
  func.func @_resident_matmul_kernel(%arg0: i32, %arg1: memref<256x128xf32, #tpu.memory_space<vmem>>, %arg2: memref<128x128xbf16, #tpu.memory_space<vmem>>, %arg3: memref<256x128xbf16, #tpu.memory_space<vmem>>) attributes {dimension_semantics = [#tpu.dimension_semantics<parallel>], iteration_bounds = array<i64: 1>, scalar_prefetch = 0 : i64, scratch_operands = 0 : i64, tpu.core_type = #tpu.core_type<tc>, window_params = [{transform_indices = @transform_0, window_bounds = array<i64: 256, 128>}, {pipeline_mode = #tpu.pipeline_mode<synchronous>, transform_indices = @transform_1, window_bounds = array<i64: 128, 128>}, {transform_indices = @transform_2, window_bounds = array<i64: 256, 128>}]} {
    %c0 = arith.constant 0 : index
    %c0_0 = arith.constant 0 : index
    %0 = vector.load %arg1[%c0, %c0_0] : memref<256x128xf32, #tpu.memory_space<vmem>>, vector<256x128xf32>
    %1 = arith.truncf %0 : vector<256x128xf32> to vector<256x128xbf16>
    %c0_1 = arith.constant 0 : index
    %c0_2 = arith.constant 0 : index
    %2 = vector.load %arg2[%c0_1, %c0_2] : memref<128x128xbf16, #tpu.memory_space<vmem>>, vector<128x128xbf16>
    %cst = arith.constant dense<0.000000e+00> : vector<256x128xf32>
    %3 = tpu.matmul %1, %2, %cst {dimension_numbers = #tpu.dot_dimension_numbers<[1], [0], [0], [1], [0, 0, 1, 1], [], []>} : vector<256x128xbf16>, vector<128x128xbf16>, vector<256x128xf32> -> vector<256x128xf32>
    %4 = arith.truncf %3 : vector<256x128xf32> to vector<256x128xbf16>
    %c0_3 = arith.constant 0 : index
    %c0_4 = arith.constant 0 : index
    %5 = vector.load %arg3[%c0_3, %c0_4] : memref<256x128xbf16, #tpu.memory_space<vmem>>, vector<256x128xbf16>
    tpu.vector_store %arg3[%c0_3, %c0_4], %4 {strides = array<i32>} : memref<256x128xbf16, #tpu.memory_space<vmem>>, vector<256x128xbf16>,
    return
  }
  func.func @transform_0(%arg0: i32) -> (i32, i32) {
    %c0_i32 = arith.constant 0 : i32
    %c0_i32_0 = arith.constant 0 : i32
    return %arg0, %c0_i32 : i32, i32
  }
  func.func @transform_1(%arg0: i32) -> (i32, i32) {
    %c0_i32 = arith.constant 0 : i32
    %c0_i32_0 = arith.constant 0 : i32
    %c0_i32_1 = arith.constant 0 : i32
    return %c0_i32, %c0_i32_0 : i32, i32
  }
  func.func @transform_2(%arg0: i32) -> (i32, i32) {
    %c0_i32 = arith.constant 0 : i32
    %c0_i32_0 = arith.constant 0 : i32
    return %arg0, %c0_i32 : i32, i32
  }
}

</mosaic_0001>

<llo_original>
// kernel: tpu_custom_call.1
$region0: #{tpu_custom_call.1}
  #allocation0 [shape = 'u32[]', space=smem, size = 0x4, offset = 0x4, fixed_abs, tag = 'smem constant byte address 0x4 - core index']
  #allocation1 [shape = 'u32[144,128]{1,0:T(1,128)}', space=vmem, size = 0x12000, scoped, tag = 'internal scratch']
  %s0 = inlined_call_operand.hbm [shape: f32[256,128], index: 0, kind: input, shape index: {}]
  %s1 = inlined_call_operand.hbm [shape: bf16[128,128], index: 1, kind: input, shape index: {}]
  %s2 = inlined_call_operand.hbm [shape: bf16[256,128], index: 2, kind: output, shape index: {}]
  %s3 = sld [smem:[#allocation0]]
  $region26: #{tpu_custom_call.1} parent=0
    _
  %s5 = ssub.s32 1, %s3
  %s6 = scalar_select 0, %s5, %s3
  $region1: #{tpu_custom_call.1} parent=0
    #allocation2 [shape = 'u8[131072]{0}', space=vmem, size = 0x20000, scoped, tag = 'input window, operand 0, single buffered']
    #allocation3 [shape = 's32[1]{0}', space=sflag, size = 0x4, scoped, tag = 'scoped memory for tpu_custom_call.1']
    #allocation4 [shape = 's32[1]{0}', space=sflag, size = 0x4, scoped, tag = 'scoped memory for tpu_custom_call.1']
    #allocation5 [shape = 'u8[32768]{0}', space=vmem, size = 0x8000, scoped, tag = 'input window, operand 1, single buffered']
    #allocation6 [shape = 's32[1]{0}', space=sflag, size = 0x4, scoped, tag = 'scoped memory for tpu_custom_call.1']
    #allocation7 [shape = 'u8[65536]{0}', space=vmem, size = 0x10000, scoped, tag = 'output window, operand 0, single buffered']
    %7 = vsyncpa [#allocation3], 0
    %8 = vsyncpa [#allocation6], 0
    %9 = vsyncpa [#allocation4], 0
    // Predicated region
    $region2: #{tpu_custom_call.1} parent=1 // pred_check
      _
    $region3: #{tpu_custom_call.1} parent=1 // pred_check_branch
      %11 = sbr.rel (0) target = $region5
    $region4: #{tpu_custom_call.1} parent=1 // pred_region
      %s13 = ssub.s32 4096, 4096
      %14 = vsyncadd [#allocation3], %s13
      %s15 = sshll.u32 [#allocation2], 4
      %s16 = int_to_ptr.vmem [resolvable:$true] %s15
      %21 = dma.hbm_to_vmem [thread:$0]  %s0, 4096, %s16, [#allocation3], 128, 128, 8
    $region5: #{tpu_custom_call.1} parent=1 // pred_fallthru
      _
    // Predicated region
    $region6: #{tpu_custom_call.1} parent=1 // pred_check
      _
    $region7: #{tpu_custom_call.1} parent=1 // pred_check_branch
      %23 = sbr.rel (0) target = $region9
    $region8: #{tpu_custom_call.1} parent=1 // pred_region
      %s25 = ssub.s32 1024, 1024
      %26 = vsyncadd [#allocation6], %s25
      %s27 = sshll.u32 [#allocation5], 4
      %s28 = int_to_ptr.vmem [resolvable:$true] %s27
      %33 = dma.hbm_to_vmem [thread:$0]  %s1, 1024, %s28, [#allocation6], 64, 64, 4
    $region9: #{tpu_custom_call.1} parent=1 // pred_fallthru
      _
    // Predicated region
    $region10: #{tpu_custom_call.1} parent=1 // pred_check
      _
    $region11: #{tpu_custom_call.1} parent=1 // pred_check_branch
      %35 = sbr.rel (0) target = $region13
    $region12: #{tpu_custom_call.1} parent=1 // pred_region
      %36 = dma.done [#allocation3], 4096
    $region13: #{tpu_custom_call.1} parent=1 // pred_fallthru
      _
    // Predicated region
    $region14: #{tpu_custom_call.1} parent=1 // pred_check
      _
    $region15: #{tpu_custom_call.1} parent=1 // pred_check_branch
      %38 = sbr.rel (0) target = $region17
    $region16: #{tpu_custom_call.1} parent=1 // pred_region
      %39 = dma.done [#allocation6], 1024
    $region17: #{tpu_custom_call.1} parent=1 // pred_fallthru
      _
    %v41 = vld [vmem:[#allocation2] sm:$0xff]
    %v42 = vld [vmem:[#allocation2 + $0x8] sm:$0xff]
    %v43 = vld [vmem:[#allocation2 + $0x10] sm:$0xff]
    %v44 = vld [vmem:[#allocation2 + $0x18] sm:$0xff]
    %v45 = vld [vmem:[#allocation2 + $0x20] sm:$0xff]
    %v46 = vld [vmem:[#allocation2 + $0x28] sm:$0xff]
    %v47 = vld [vmem:[#allocation2 + $0x30] sm:$0xff]
    %v48 = vld [vmem:[#allocation2 + $0x38] sm:$0xff]
    %v49 = vld [vmem:[#allocation2 + $0x40] sm:$0xff]
    %v50 = vld [vmem:[#allocation2 + $0x48] sm:$0xff]
    %v51 = vld [vmem:[#allocation2 + $0x50] sm:$0xff]
    %v52 = vld [vmem:[#allocation2 + $0x58] sm:$0xff]
    %v53 = vld [vmem:[#allocation2 + $0x60] sm:$0xff]
    %v54 = vld [vmem:[#allocation2 + $0x68] sm:$0xff]
    %v55 = vld [vmem:[#allocation2 + $0x70] sm:$0xff]
    %v56 = vld [vmem:[#allocation2 + $0x78] sm:$0xff]
    %v57 = vld [vmem:[#allocation2 + $0x80] sm:$0xff]
    %v58 = vld [vmem:[#allocation2 + $0x88] sm:$0xff]
    %v59 = vld [vmem:[#allocation2 + $0x90] sm:$0xff]
    %v60 = vld [vmem:[#allocation2 + $0x98] sm:$0xff]
    %v61 = vld [vmem:[#allocation2 + $0xa0] sm:$0xff]
    %v62 = vld [vmem:[#allocation2 + $0xa8] sm:$0xff]
    %v63 = vld [vmem:[#allocation2 + $0xb0] sm:$0xff]
    %v64 = vld [vmem:[#allocation2 + $0xb8] sm:$0xff]
    %v65 = vld [vmem:[#allocation2 + $0xc0] sm:$0xff]
    %v66 = vld [vmem:[#allocation2 + $0xc8] sm:$0xff]
    %v67 = vld [vmem:[#allocation2 + $0xd0] sm:$0xff]
    %v68 = vld [vmem:[#allocation2 + $0xd8] sm:$0xff]
    %v69 = vld [vmem:[#allocation2 + $0xe0] sm:$0xff]
    %v70 = vld [vmem:[#allocation2 + $0xe8] sm:$0xff]
    %v71 = vld [vmem:[#allocation2 + $0xf0] sm:$0xff]
    %v72 = vld [vmem:[#allocation2 + $0xf8] sm:$0xff]
    %v73 = vpack.c.bf16 %v42, %v41
    %v74 = vpack.c.bf16 %v44, %v43
    %v75 = vpack.c.bf16 %v46, %v45
    %v76 = vpack.c.bf16 %v48, %v47
    %v77 = vpack.c.bf16 %v50, %v49
    %v78 = vpack.c.bf16 %v52, %v51
    %v79 = vpack.c.bf16 %v54, %v53
    %v80 = vpack.c.bf16 %v56, %v55
    %v81 = vpack.c.bf16 %v58, %v57
    %v82 = vpack.c.bf16 %v60, %v59
    %v83 = vpack.c.bf16 %v62, %v61
    %v84 = vpack.c.bf16 %v64, %v63
    %v85 = vpack.c.bf16 %v66, %v65
    %v86 = vpack.c.bf16 %v68, %v67
    %v87 = vpack.c.bf16 %v70, %v69
    %v88 = vpack.c.bf16 %v72, %v71
    %v89 = vld [vmem:[#allocation5] sm:$0xf]
    %v90 = vld [vmem:[#allocation5 + $0x4] sm:$0xf]
    %v91 = vld [vmem:[#allocation5 + $0x8] sm:$0xf]
    %v92 = vld [vmem:[#allocation5 + $0xc] sm:$0xf]
    %v93 = vld [vmem:[#allocation5 + $0x10] sm:$0xf]
    %v94 = vld [vmem:[#allocation5 + $0x14] sm:$0xf]
    %v95 = vld [vmem:[#allocation5 + $0x18] sm:$0xf]
    %v96 = vld [vmem:[#allocation5 + $0x1c] sm:$0xf]
    %v97 = vld [vmem:[#allocation5 + $0x20] sm:$0xf]
    %v98 = vld [vmem:[#allocation5 + $0x24] sm:$0xf]
    %v99 = vld [vmem:[#allocation5 + $0x28] sm:$0xf]
    %v100 = vld [vmem:[#allocation5 + $0x2c] sm:$0xf]
    %v101 = vld [vmem:[#allocation5 + $0x30] sm:$0xf]
    %v102 = vld [vmem:[#allocation5 + $0x34] sm:$0xf]
    %v103 = vld [vmem:[#allocation5 + $0x38] sm:$0xf]
    %v104 = vld [vmem:[#allocation5 + $0x3c] sm:$0xf]
    %v121 = vunpack.c.l.b16 %v89
    %v122 = vunpack.c.l.b16 %v90
    %v123 = vunpack.c.l.b16 %v91
    %v124 = vunpack.c.l.b16 %v92
    %v125 = vunpack.c.l.b16 %v93
    %v126 = vunpack.c.l.b16 %v94
    %v127 = vunpack.c.l.b16 %v95
    %v128 = vunpack.c.l.b16 %v96
    %v129 = vunpack.c.l.b16 %v97
    %v130 = vunpack.c.l.b16 %v98
    %v131 = vunpack.c.l.b16 %v99
    %v132 = vunpack.c.l.b16 %v100
    %v133 = vunpack.c.l.b16 %v101
    %v134 = vunpack.c.l.b16 %v102
    %v135 = vunpack.c.l.b16 %v103
    %v136 = vunpack.c.l.b16 %v104
    %v137 = vpack.c.b16 %v122, %v121
    %v138 = vpack.c.b16 %v124, %v123
    %v139 = vpack.c.b16 %v126, %v125
    %v140 = vpack.c.b16 %v128, %v127
    %v141 = vpack.c.b16 %v130, %v129
    %v142 = vpack.c.b16 %v132, %v131
    %v143 = vpack.c.b16 %v134, %v133
    %v144 = vpack.c.b16 %v136, %v135
    %153 = vmatprep.subr.bf16.mxu0 0
    %154 = vmatpush1.bf16.msra.mxu0 %v144
    %155 = vmatprep.subr.bf16.mxu0 0
    %156 = vmatpush1.bf16.msra.mxu0 %v143
    %157 = vmatprep.subr.bf16.mxu0 0
    %158 = vmatpush1.bf16.msra.mxu0 %v142
    %159 = vmatprep.subr.bf16.mxu0 0
    %160 = vmatpush1.bf16.msra.mxu0 %v141
    %161 = vmatprep.subr.bf16.mxu0 0
    %162 = vmatpush1.bf16.msra.mxu0 %v140
    %163 = vmatprep.subr.bf16.mxu0 0
    %164 = vmatpush1.bf16.msra.mxu0 %v139
    %165 = vmatprep.subr.bf16.mxu0 0
    %166 = vmatpush1.bf16.msra.mxu0 %v138
    %167 = vmatprep.subr.bf16.mxu0 0
    %168 = vmatpush1.bf16.msra.mxu0 %v137
    %169 = vmatprep.subr.bf16.mxu0 0
    %170 = vmatpush2.bf16.msra.mxu0 0
    %171 = vmatprep.subr.bf16.mxu0 0
    %172 = vmatpush2.bf16.msra.mxu0 0
    %173 = vmatprep.subr.bf16.mxu0 0
    %174 = vmatpush2.bf16.msra.mxu0 0
    %175 = vmatprep.subr.bf16.mxu0 0
    %176 = vmatpush2.bf16.msra.mxu0 0
    %177 = vmatprep.subr.bf16.mxu0 0
    %178 = vmatpush2.bf16.msra.mxu0 0
    %179 = vmatprep.subr.bf16.mxu0 0
    %180 = vmatpush2.bf16.msra.mxu0 0
    %181 = vmatprep.subr.bf16.mxu0 0
    %182 = vmatpush2.bf16.msra.mxu0 0
    %183 = vmatprep.subr.bf16.mxu0 0
    %184 = vmatpush2.bf16.msra.mxu0 0
    %185 = vmatprep.mubr.bf16.mxu0 0
    %186 = vmatmul.mubr.bf16.gmra.mxu0 %v73
    %v187 = vpop.f32.mrf.mxu0
    %v188 = vadd.f32 0.0, %v187
    %v189 = vpop.f32.mrf.mxu0
    %v190 = vpop.f32.mrf.mxu0
    %v191 = vadd.f32 0.0, %v190
    %v192 = vpop.f32.mrf.mxu0
    %193 = vmatprep.mubr.bf16.mxu0 0
    %194 = vmatmul.mubr.bf16.gmra.mxu0 %v74
    %v195 = vpop.f32.mrf.mxu0
    %v196 = vadd.f32 0.0, %v195
    %v197 = vpop.f32.mrf.mxu0
    %v198 = vpop.f32.mrf.mxu0
    %v199 = vadd.f32 0.0, %v198
    %v200 = vpop.f32.mrf.mxu0
    %201 = vmatprep.mubr.bf16.mxu0 0
    %202 = vmatmul.mubr.bf16.gmra.mxu0 %v75
    %v203 = vpop.f32.mrf.mxu0
    %v204 = vadd.f32 0.0, %v203
    %v205 = vpop.f32.mrf.mxu0
    %v206 = vpop.f32.mrf.mxu0
    %v207 = vadd.f32 0.0, %v206
    %v208 = vpop.f32.mrf.mxu0
    %209 = vmatprep.mubr.bf16.mxu0 0
    %210 = vmatmul.mubr.bf16.gmra.mxu0 %v76
    %v211 = vpop.f32.mrf.mxu0
    %v212 = vadd.f32 0.0, %v211
    %v213 = vpop.f32.mrf.mxu0
    %v214 = vpop.f32.mrf.mxu0
    %v215 = vadd.f32 0.0, %v214
    %v216 = vpop.f32.mrf.mxu0
    %217 = vmatprep.mubr.bf16.mxu0 0
    %218 = vmatmul.mubr.bf16.gmra.mxu0 %v77
    %v219 = vpop.f32.mrf.mxu0
    %v220 = vadd.f32 0.0, %v219
    %v221 = vpop.f32.mrf.mxu0
    %v222 = vpop.f32.mrf.mxu0
    %v223 = vadd.f32 0.0, %v222
    %v224 = vpop.f32.mrf.mxu0
    %225 = vmatprep.mubr.bf16.mxu0 0
    %226 = vmatmul.mubr.bf16.gmra.mxu0 %v78
    %v227 = vpop.f32.mrf.mxu0
    %v228 = vadd.f32 0.0, %v227
    %v229 = vpop.f32.mrf.mxu0
    %v230 = vpop.f32.mrf.mxu0
    %v231 = vadd.f32 0.0, %v230
    %v232 = vpop.f32.mrf.mxu0
    %233 = vmatprep.mubr.bf16.mxu0 0
    %234 = vmatmul.mubr.bf16.gmra.mxu0 %v79
    %v235 = vpop.f32.mrf.mxu0
    %v236 = vadd.f32 0.0, %v235
    %v237 = vpop.f32.mrf.mxu0
    %v238 = vpop.f32.mrf.mxu0
    %v239 = vadd.f32 0.0, %v238
    %v240 = vpop.f32.mrf.mxu0
    %241 = vmatprep.mubr.bf16.mxu0 0
    %242 = vmatmul.mubr.bf16.gmra.mxu0 %v80
    %v243 = vpop.f32.mrf.mxu0
    %v244 = vadd.f32 0.0, %v243
    %v245 = vpop.f32.mrf.mxu0
    %v246 = vpop.f32.mrf.mxu0
    %v247 = vadd.f32 0.0, %v246
    %v248 = vpop.f32.mrf.mxu0
    %249 = vmatprep.mubr.bf16.mxu0 0
    %250 = vmatmul.mubr.bf16.gmra.mxu0 %v81
    %v251 = vpop.f32.mrf.mxu0
    %v252 = vadd.f32 0.0, %v251
    %v253 = vpop.f32.mrf.mxu0
    %v254 = vpop.f32.mrf.mxu0
    %v255 = vadd.f32 0.0, %v254
    %v256 = vpop.f32.mrf.mxu0
    %257 = vmatprep.mubr.bf16.mxu0 0
    %258 = vmatmul.mubr.bf16.gmra.mxu0 %v82
    %v259 = vpop.f32.mrf.mxu0
    %v260 = vadd.f32 0.0, %v259
    %v261 = vpop.f32.mrf.mxu0
    %v262 = vpop.f32.mrf.mxu0
    %v263 = vadd.f32 0.0, %v262
    %v264 = vpop.f32.mrf.mxu0
    %265 = vmatprep.mubr.bf16.mxu0 0
    %266 = vmatmul.mubr.bf16.gmra.mxu0 %v83
    %v267 = vpop.f32.mrf.mxu0
    %v268 = vadd.f32 0.0, %v267
    %v269 = vpop.f32.mrf.mxu0
    %v270 = vpop.f32.mrf.mxu0
    %v271 = vadd.f32 0.0, %v270
    %v272 = vpop.f32.mrf.mxu0
    %273 = vmatprep.mubr.bf16.mxu0 0
    %274 = vmatmul.mubr.bf16.gmra.mxu0 %v84
    %v275 = vpop.f32.mrf.mxu0
    %v276 = vadd.f32 0.0, %v275
    %v277 = vpop.f32.mrf.mxu0
    %v278 = vpop.f32.mrf.mxu0
    %v279 = vadd.f32 0.0, %v278
    %v280 = vpop.f32.mrf.mxu0
    %281 = vmatprep.mubr.bf16.mxu0 0
    %282 = vmatmul.mubr.bf16.gmra.mxu0 %v85
    %v283 = vpop.f32.mrf.mxu0
    %v284 = vadd.f32 0.0, %v283
    %v285 = vpop.f32.mrf.mxu0
    %v286 = vpop.f32.mrf.mxu0
    %v287 = vadd.f32 0.0, %v286
    %v288 = vpop.f32.mrf.mxu0
    %289 = vmatprep.mubr.bf16.mxu0 0
    %290 = vmatmul.mubr.bf16.gmra.mxu0 %v86
    %v291 = vpop.f32.mrf.mxu0
    %v292 = vadd.f32 0.0, %v291
    %v293 = vpop.f32.mrf.mxu0
    %v294 = vpop.f32.mrf.mxu0
    %v295 = vadd.f32 0.0, %v294
    %v296 = vpop.f32.mrf.mxu0
    %297 = vmatprep.mubr.bf16.mxu0 0
    %298 = vmatmul.mubr.bf16.gmra.mxu0 %v87
    %v299 = vpop.f32.mrf.mxu0
    %v300 = vadd.f32 0.0, %v299
    %v301 = vpop.f32.mrf.mxu0
    %v302 = vpop.f32.mrf.mxu0
    %v303 = vadd.f32 0.0, %v302
    %v304 = vpop.f32.mrf.mxu0
    %305 = vmatprep.mubr.bf16.mxu0 0
    %306 = vmatmul.mubr.bf16.gmra.mxu0 %v88
    %v307 = vpop.f32.mrf.mxu0
    %v308 = vadd.f32 0.0, %v307
    %v309 = vpop.f32.mrf.mxu0
    %v310 = vpop.f32.mrf.mxu0
    %v311 = vadd.f32 0.0, %v310
    %v312 = vpop.f32.mrf.mxu0
    %313 = vdwg.mxu0
    %v314 = vpack.c.bf16 %v191, %v188
    %v315 = vpack.c.bf16 %v199, %v196
    %v316 = vpack.c.bf16 %v207, %v204
    %v317 = vpack.c.bf16 %v215, %v212
    %v318 = vpack.c.bf16 %v223, %v220
    %v319 = vpack.c.bf16 %v231, %v228
    %v320 = vpack.c.bf16 %v239, %v236
    %v321 = vpack.c.bf16 %v247, %v244
    %v322 = vpack.c.bf16 %v255, %v252
    %v323 = vpack.c.bf16 %v263, %v260
    %v324 = vpack.c.bf16 %v271, %v268
    %v325 = vpack.c.bf16 %v279, %v276
    %v326 = vpack.c.bf16 %v287, %v284
    %v327 = vpack.c.bf16 %v295, %v292
    %v328 = vpack.c.bf16 %v303, %v300
    %v329 = vpack.c.bf16 %v311, %v308
    %v346 = vunpack.c.l.b16 %v314
    %v347 = vunpack.c.h.b16 %v314
    %v348 = vunpack.c.l.b16 %v315
    %v349 = vunpack.c.h.b16 %v315
    %v350 = vunpack.c.l.b16 %v316
    %v351 = vunpack.c.h.b16 %v316
    %v352 = vunpack.c.l.b16 %v317
    %v353 = vunpack.c.h.b16 %v317
    %v354 = vunpack.c.l.b16 %v318
    %v355 = vunpack.c.h.b16 %v318
    %v356 = vunpack.c.l.b16 %v319
    %v357 = vunpack.c.h.b16 %v319
    %v358 = vunpack.c.l.b16 %v320
    %v359 = vunpack.c.h.b16 %v320
    %v360 = vunpack.c.l.b16 %v321
    %v361 = vunpack.c.h.b16 %v321
    %v362 = vunpack.c.l.b16 %v322
    %v363 = vunpack.c.h.b16 %v322
    %v364 = vunpack.c.l.b16 %v323
    %v365 = vunpack.c.h.b16 %v323
    %v366 = vunpack.c.l.b16 %v324
    %v367 = vunpack.c.h.b16 %v324
    %v368 = vunpack.c.l.b16 %v325
    %v369 = vunpack.c.h.b16 %v325
    %v370 = vunpack.c.l.b16 %v326
    %v371 = vunpack.c.h.b16 %v326
    %v372 = vunpack.c.l.b16 %v327
    %v373 = vunpack.c.h.b16 %v327
    %v374 = vunpack.c.l.b16 %v328
    %v375 = vunpack.c.h.b16 %v328
    %v376 = vunpack.c.l.b16 %v329
    %v377 = vunpack.c.h.b16 %v329
    %v378 = vpack.c.b16 %v346, %v346
    %v379 = vpack.c.b16 %v347, %v347
    %v380 = vpack.c.b16 %v348, %v348
    %v381 = vpack.c.b16 %v349, %v349
    %v382 = vpack.c.b16 %v350, %v350
    %v383 = vpack.c.b16 %v351, %v351
    %v384 = vpack.c.b16 %v352, %v352
    %v385 = vpack.c.b16 %v353, %v353
    %v386 = vpack.c.b16 %v354, %v354
    %v387 = vpack.c.b16 %v355, %v355
    %v388 = vpack.c.b16 %v356, %v356
    %v389 = vpack.c.b16 %v357, %v357
    %v390 = vpack.c.b16 %v358, %v358
    %v391 = vpack.c.b16 %v359, %v359
    %v392 = vpack.c.b16 %v360, %v360
    %v393 = vpack.c.b16 %v361, %v361
    %v394 = vpack.c.b16 %v362, %v362
    %v395 = vpack.c.b16 %v363, %v363
    %v396 = vpack.c.b16 %v364, %v364
    %v397 = vpack.c.b16 %v365, %v365
    %v398 = vpack.c.b16 %v366, %v366
    %v399 = vpack.c.b16 %v367, %v367
    %v400 = vpack.c.b16 %v368, %v368
    %v401 = vpack.c.b16 %v369, %v369
    %v402 = vpack.c.b16 %v370, %v370
    %v403 = vpack.c.b16 %v371, %v371
    %v404 = vpack.c.b16 %v372, %v372
    %v405 = vpack.c.b16 %v373, %v373
    %v406 = vpack.c.b16 %v374, %v374
    %v407 = vpack.c.b16 %v375, %v375
    %v408 = vpack.c.b16 %v376, %v376
    %v409 = vpack.c.b16 %v377, %v377
    %442 = vst [vmem:[#allocation7] sm:$0xf] %v378
    %443 = vst [vmem:[#allocation7 + $0x4] sm:$0xf] %v379
    %444 = vst [vmem:[#allocation7 + $0x8] sm:$0xf] %v380
    %445 = vst [vmem:[#allocation7 + $0xc] sm:$0xf] %v381
    %446 = vst [vmem:[#allocation7 + $0x10] sm:$0xf] %v382
    %447 = vst [vmem:[#allocation7 + $0x14] sm:$0xf] %v383
    %448 = vst [vmem:[#allocation7 + $0x18] sm:$0xf] %v384
    %449 = vst [vmem:[#allocation7 + $0x1c] sm:$0xf] %v385
    %450 = vst [vmem:[#allocation7 + $0x20] sm:$0xf] %v386
    %451 = vst [vmem:[#allocation7 + $0x24] sm:$0xf] %v387
    %452 = vst [vmem:[#allocation7 + $0x28] sm:$0xf] %v388
    %453 = vst [vmem:[#allocation7 + $0x2c] sm:$0xf] %v389
    %454 = vst [vmem:[#allocation7 + $0x30] sm:$0xf] %v390
    %455 = vst [vmem:[#allocation7 + $0x34] sm:$0xf] %v391
    %456 = vst [vmem:[#allocation7 + $0x38] sm:$0xf] %v392
    %457 = vst [vmem:[#allocation7 + $0x3c] sm:$0xf] %v393
    %458 = vst [vmem:[#allocation7 + $0x40] sm:$0xf] %v394
    %459 = vst [vmem:[#allocation7 + $0x44] sm:$0xf] %v395
    %460 = vst [vmem:[#allocation7 + $0x48] sm:$0xf] %v396
    %461 = vst [vmem:[#allocation7 + $0x4c] sm:$0xf] %v397
    %462 = vst [vmem:[#allocation7 + $0x50] sm:$0xf] %v398
    %463 = vst [vmem:[#allocation7 + $0x54] sm:$0xf] %v399
    %464 = vst [vmem:[#allocation7 + $0x58] sm:$0xf] %v400
    %465 = vst [vmem:[#allocation7 + $0x5c] sm:$0xf] %v401
    %466 = vst [vmem:[#allocation7 + $0x60] sm:$0xf] %v402
    %467 = vst [vmem:[#allocation7 + $0x64] sm:$0xf] %v403
    %468 = vst [vmem:[#allocation7 + $0x68] sm:$0xf] %v404
    %469 = vst [vmem:[#allocation7 + $0x6c] sm:$0xf] %v405
    %470 = vst [vmem:[#allocation7 + $0x70] sm:$0xf] %v406
    %471 = vst [vmem:[#allocation7 + $0x74] sm:$0xf] %v407
    %472 = vst [vmem:[#allocation7 + $0x78] sm:$0xf] %v408
    %473 = vst [vmem:[#allocation7 + $0x7c] sm:$0xf] %v409
    // Predicated region
    $region18: #{tpu_custom_call.1} parent=1 // pred_check
      _
    $region19: #{tpu_custom_call.1} parent=1 // pred_check_branch
      %475 = sbr.rel (0) target = $region21
    $region20: #{tpu_custom_call.1} parent=1 // pred_region
      %s477 = ssub.s32 2048, 2048
      %478 = vsyncadd [#allocation4], %s477
      %s479 = sshll.u32 [#allocation7], 4
      %s480 = int_to_ptr.vmem [resolvable:$true] %s479
      %485 = dma.vmem_to_hbm [thread:$0]  %s480, 2048, %s2, [#allocation4], 64, 64, 4
    $region21: #{tpu_custom_call.1} parent=1 // pred_fallthru
      _
    // Predicated region
    $region22: #{tpu_custom_call.1} parent=1 // pred_check
      _
    $region23: #{tpu_custom_call.1} parent=1 // pred_check_branch
      %487 = sbr.rel (0) target = $region25
    $region24: #{tpu_custom_call.1} parent=1 // pred_region
      %488 = dma.done [#allocation4], 2048
    $region25: #{tpu_custom_call.1} parent=1 // pred_fallthru
      _
    %489 = vsyncpa [#allocation3], 1
    %490 = vsyncpa [#allocation6], 1
    %491 = vsyncpa [#allocation4], 1

// kernel: tpu_custom_call.1
$region0: #{tpu_custom_call.1}
  #allocation0 [shape = 'u32[]', space=smem, size = 0x4, offset = 0x4, fixed_abs, tag = 'smem constant byte address 0x4 - core index']
  #allocation1 [shape = 'u32[144,128]{1,0:T(1,128)}', space=vmem, size = 0x12000, scoped, tag = 'internal scratch']
  %s0 = inlined_call_operand.hbm [shape: f32[256,128], index: 0, kind: input, shape index: {}]
  %s1 = inlined_call_operand.hbm [shape: bf16[128,128], index: 1, kind: input, shape index: {}]
  %s2 = inlined_call_operand.hbm [shape: bf16[256,128], index: 2, kind: output, shape index: {}]
  %s3 = sld [smem:[#allocation0]]
  $region26: #{tpu_custom_call.1} parent=0
    _
  %s5 = ssub.s32 1, %s3
  %s6 = scalar_select 0, %s5, %s3
  $region1: #{tpu_custom_call.1} parent=0
    #allocation2 [shape = 'u8[131072]{0}', space=vmem, size = 0x20000, scoped, tag = 'input window, operand 0, single buffered']
    #allocation3 [shape = 's32[1]{0}', space=sflag, size = 0x4, scoped, tag = 'scoped memory for tpu_custom_call.1']
    #allocation4 [shape = 's32[1]{0}', space=sflag, size = 0x4, scoped, tag = 'scoped memory for tpu_custom_call.1']
    #allocation5 [shape = 'u8[32768]{0}', space=vmem, size = 0x8000, scoped, tag = 'input window, operand 1, single buffered']
    #allocation6 [shape = 's32[1]{0}', space=sflag, size = 0x4, scoped, tag = 'scoped memory for tpu_custom_call.1']
    #allocation7 [shape = 'u8[65536]{0}', space=vmem, size = 0x10000, scoped, tag = 'output window, operand 0, single buffered']
    %7 = vsyncpa [#allocation3], 0
    %8 = vsyncpa [#allocation6], 0
    %9 = vsyncpa [#allocation4], 0
    // Predicated region
    $region2: #{tpu_custom_call.1} parent=1 // pred_check
      _
    $region3: #{tpu_custom_call.1} parent=1 // pred_check_branch
      %11 = sbr.rel (0) target = $region5
    $region4: #{tpu_custom_call.1} parent=1 // pred_region
      %s13 = ssub.s32 4096, 4096
      %14 = vsyncadd [#allocation3], %s13
      %s15 = sshll.u32 [#allocation2], 4
      %s16 = int_to_ptr.vmem [resolvable:$true] %s15
      %21 = dma.hbm_to_vmem [thread:$0]  %s0, 4096, %s16, [#allocation3], 128, 128, 8
    $region5: #{tpu_custom_call.1} parent=1 // pred_fallthru
      _
    // Predicated region
    $region6: #{tpu_custom_call.1} parent=1 // pred_check
      _
    $region7: #{tpu_custom_call.1} parent=1 // pred_check_branch
      %23 = sbr.rel (0) target = $region9
    $region8: #{tpu_custom_call.1} parent=1 // pred_region
      %s25 = ssub.s32 1024, 1024
      %26 = vsyncadd [#allocation6], %s25
      %s27 = sshll.u32 [#allocation5], 4
      %s28 = int_to_ptr.vmem [resolvable:$true] %s27
      %33 = dma.hbm_to_vmem [thread:$0]  %s1, 1024, %s28, [#allocation6], 64, 64, 4
    $region9: #{tpu_custom_call.1} parent=1 // pred_fallthru
      _
    // Predicated region
    $region10: #{tpu_custom_call.1} parent=1 // pred_check
      _
    $region11: #{tpu_custom_call.1} parent=1 // pred_check_branch
      %35 = sbr.rel (0) target = $region13
    $region12: #{tpu_custom_call.1} parent=1 // pred_region
      %36 = dma.done [#allocation3], 4096
    $region13: #{tpu_custom_call.1} parent=1 // pred_fallthru
      _
    // Predicated region
    $region14: #{tpu_custom_call.1} parent=1 // pred_check
      _
    $region15: #{tpu_custom_call.1} parent=1 // pred_check_branch
      %38 = sbr.rel (0) target = $region17
    $region16: #{tpu_custom_call.1} parent=1 // pred_region
      %39 = dma.done [#allocation6], 1024
    $region17: #{tpu_custom_call.1} parent=1 // pred_fallthru
      _
    %v41 = vld [vmem:[#allocation2] sm:$0xff]
    %v42 = vld [vmem:[#allocation2 + $0x8] sm:$0xff]
    %v43 = vld [vmem:[#allocation2 + $0x10] sm:$0xff]
    %v44 = vld [vmem:[#allocation2 + $0x18] sm:$0xff]
    %v45 = vld [vmem:[#allocation2 + $0x20] sm:$0xff]
    %v46 = vld [vmem:[#allocation2 + $0x28] sm:$0xff]
    %v47 = vld [vmem:[#allocation2 + $0x30] sm:$0xff]
    %v48 = vld [vmem:[#allocation2 + $0x38] sm:$0xff]
    %v49 = vld [vmem:[#allocation2 + $0x40] sm:$0xff]
    %v50 = vld [vmem:[#allocation2 + $0x48] sm:$0xff]
    %v51 = vld [vmem:[#allocation2 + $0x50] sm:$0xff]
    %v52 = vld [vmem:[#allocation2 + $0x58] sm:$0xff]
    %v53 = vld [vmem:[#allocation2 + $0x60] sm:$0xff]
    %v54 = vld [vmem:[#allocation2 + $0x68] sm:$0xff]
    %v55 = vld [vmem:[#allocation2 + $0x70] sm:$0xff]
    %v56 = vld [vmem:[#allocation2 + $0x78] sm:$0xff]
    %v57 = vld [vmem:[#allocation2 + $0x80] sm:$0xff]
    %v58 = vld [vmem:[#allocation2 + $0x88] sm:$0xff]
    %v59 = vld [vmem:[#allocation2 + $0x90] sm:$0xff]
    %v60 = vld [vmem:[#allocation2 + $0x98] sm:$0xff]
    %v61 = vld [vmem:[#allocation2 + $0xa0] sm:$0xff]
    %v62 = vld [vmem:[#allocation2 + $0xa8] sm:$0xff]
    %v63 = vld [vmem:[#allocation2 + $0xb0] sm:$0xff]
    %v64 = vld [vmem:[#allocation2 + $0xb8] sm:$0xff]
    %v65 = vld [vmem:[#allocation2 + $0xc0] sm:$0xff]
    %v66 = vld [vmem:[#allocation2 + $0xc8] sm:$0xff]
    %v67 = vld [vmem:[#allocation2 + $0xd0] sm:$0xff]
    %v68 = vld [vmem:[#allocation2 + $0xd8] sm:$0xff]
    %v69 = vld [vmem:[#allocation2 + $0xe0] sm:$0xff]
    %v70 = vld [vmem:[#allocation2 + $0xe8] sm:$0xff]
    %v71 = vld [vmem:[#allocation2 + $0xf0] sm:$0xff]
    %v72 = vld [vmem:[#allocation2 + $0xf8] sm:$0xff]
    %v73 = vpack.c.bf16 %v42, %v41
    %v74 = vpack.c.bf16 %v44, %v43
    %v75 = vpack.c.bf16 %v46, %v45
    %v76 = vpack.c.bf16 %v48, %v47
    %v77 = vpack.c.bf16 %v50, %v49
    %v78 = vpack.c.bf16 %v52, %v51
    %v79 = vpack.c.bf16 %v54, %v53
    %v80 = vpack.c.bf16 %v56, %v55
    %v81 = vpack.c.bf16 %v58, %v57
    %v82 = vpack.c.bf16 %v60, %v59
    %v83 = vpack.c.bf16 %v62, %v61
    %v84 = vpack.c.bf16 %v64, %v63
    %v85 = vpack.c.bf16 %v66, %v65
    %v86 = vpack.c.bf16 %v68, %v67
    %v87 = vpack.c.bf16 %v70, %v69
    %v88 = vpack.c.bf16 %v72, %v71
    %v89 = vld [vmem:[#allocation5] sm:$0xf]
    %v90 = vld [vmem:[#allocation5 + $0x4] sm:$0xf]
    %v91 = vld [vmem:[#allocation5 + $0x8] sm:$0xf]
    %v92 = vld [vmem:[#allocation5 + $0xc] sm:$0xf]
    %v93 = vld [vmem:[#allocation5 + $0x10] sm:$0xf]
    %v94 = vld [vmem:[#allocation5 + $0x14] sm:$0xf]
    %v95 = vld [vmem:[#allocation5 + $0x18] sm:$0xf]
    %v96 = vld [vmem:[#allocation5 + $0x1c] sm:$0xf]
    %v97 = vld [vmem:[#allocation5 + $0x20] sm:$0xf]
    %v98 = vld [vmem:[#allocation5 + $0x24] sm:$0xf]
    %v99 = vld [vmem:[#allocation5 + $0x28] sm:$0xf]
    %v100 = vld [vmem:[#allocation5 + $0x2c] sm:$0xf]
    %v101 = vld [vmem:[#allocation5 + $0x30] sm:$0xf]
    %v102 = vld [vmem:[#allocation5 + $0x34] sm:$0xf]
    %v103 = vld [vmem:[#allocation5 + $0x38] sm:$0xf]
    %v104 = vld [vmem:[#allocation5 + $0x3c] sm:$0xf]
    %v121 = vunpack.c.l.b16 %v89
    %v122 = vunpack.c.l.b16 %v90
    %v123 = vunpack.c.l.b16 %v91
    %v124 = vunpack.c.l.b16 %v92
    %v125 = vunpack.c.l.b16 %v93
    %v126 = vunpack.c.l.b16 %v94
    %v127 = vunpack.c.l.b16 %v95
    %v128 = vunpack.c.l.b16 %v96
    %v129 = vunpack.c.l.b16 %v97
    %v130 = vunpack.c.l.b16 %v98
    %v131 = vunpack.c.l.b16 %v99
    %v132 = vunpack.c.l.b16 %v100
    %v133 = vunpack.c.l.b16 %v101
    %v134 = vunpack.c.l.b16 %v102
    %v135 = vunpack.c.l.b16 %v103
    %v136 = vunpack.c.l.b16 %v104
    %v137 = vpack.c.b16 %v122, %v121
    %v138 = vpack.c.b16 %v124, %v123
    %v139 = vpack.c.b16 %v126, %v125
    %v140 = vpack.c.b16 %v128, %v127
    %v141 = vpack.c.b16 %v130, %v129
    %v142 = vpack.c.b16 %v132, %v131
    %v143 = vpack.c.b16 %v134, %v133
    %v144 = vpack.c.b16 %v136, %v135
    %153 = vmatprep.subr.bf16.mxu0 0
    %154 = vmatpush1.bf16.msra.mxu0 %v144
    %155 = vmatprep.subr.bf16.mxu0 0
    %156 = vmatpush1.bf16.msra.mxu0 %v143
    %157 = vmatprep.subr.bf16.mxu0 0
    %158 = vmatpush1.bf16.msra.mxu0 %v142
    %159 = vmatprep.subr.bf16.mxu0 0
    %160 = vmatpush1.bf16.msra.mxu0 %v141
    %161 = vmatprep.subr.bf16.mxu0 0
    %162 = vmatpush1.bf16.msra.mxu0 %v140
    %163 = vmatprep.subr.bf16.mxu0 0
    %164 = vmatpush1.bf16.msra.mxu0 %v139
    %165 = vmatprep.subr.bf16.mxu0 0
    %166 = vmatpush1.bf16.msra.mxu0 %v138
    %167 = vmatprep.subr.bf16.mxu0 0
    %168 = vmatpush1.bf16.msra.mxu0 %v137
    %169 = vmatprep.subr.bf16.mxu0 0
    %170 = vmatpush2.bf16.msra.mxu0 0
    %171 = vmatprep.subr.bf16.mxu0 0
    %172 = vmatpush2.bf16.msra.mxu0 0
    %173 = vmatprep.subr.bf16.mxu0 0
    %174 = vmatpush2.bf16.msra.mxu0 0
    %175 = vmatprep.subr.bf16.mxu0 0
    %176 = vmatpush2.bf16.msra.mxu0 0
    %177 = vmatprep.subr.bf16.mxu0 0
    %178 = vmatpush2.bf16.msra.mxu0 0
    %179 = vmatprep.subr.bf16.mxu0 0
    %180 = vmatpush2.bf16.msra.mxu0 0
    %181 = vmatprep.subr.bf16.mxu0 0
    %182 = vmatpush2.bf16.msra.mxu0 0
    %183 = vmatprep.subr.bf16.mxu0 0
    %184 = vmatpush2.bf16.msra.mxu0 0
    %185 = vmatprep.mubr.bf16.mxu0 0
    %186 = vmatmul.mubr.bf16.gmra.mxu0 %v73
    %v187 = vpop.f32.mrf.mxu0
    %v188 = vadd.f32 0.0, %v187
    %v189 = vpop.f32.mrf.mxu0
    %v190 = vpop.f32.mrf.mxu0
    %v191 = vadd.f32 0.0, %v190
    %v192 = vpop.f32.mrf.mxu0
    %193 = vmatprep.mubr.bf16.mxu0 0
    %194 = vmatmul.mubr.bf16.gmra.mxu0 %v74
    %v195 = vpop.f32.mrf.mxu0
    %v196 = vadd.f32 0.0, %v195
    %v197 = vpop.f32.mrf.mxu0
    %v198 = vpop.f32.mrf.mxu0
    %v199 = vadd.f32 0.0, %v198
    %v200 = vpop.f32.mrf.mxu0
    %201 = vmatprep.mubr.bf16.mxu0 0
    %202 = vmatmul.mubr.bf16.gmra.mxu0 %v75
    %v203 = vpop.f32.mrf.mxu0
    %v204 = vadd.f32 0.0, %v203
    %v205 = vpop.f32.mrf.mxu0
    %v206 = vpop.f32.mrf.mxu0
    %v207 = vadd.f32 0.0, %v206
    %v208 = vpop.f32.mrf.mxu0
    %209 = vmatprep.mubr.bf16.mxu0 0
    %210 = vmatmul.mubr.bf16.gmra.mxu0 %v76
    %v211 = vpop.f32.mrf.mxu0
    %v212 = vadd.f32 0.0, %v211
    %v213 = vpop.f32.mrf.mxu0
    %v214 = vpop.f32.mrf.mxu0
    %v215 = vadd.f32 0.0, %v214
    %v216 = vpop.f32.mrf.mxu0
    %217 = vmatprep.mubr.bf16.mxu0 0
    %218 = vmatmul.mubr.bf16.gmra.mxu0 %v77
    %v219 = vpop.f32.mrf.mxu0
    %v220 = vadd.f32 0.0, %v219
    %v221 = vpop.f32.mrf.mxu0
    %v222 = vpop.f32.mrf.mxu0
    %v223 = vadd.f32 0.0, %v222
    %v224 = vpop.f32.mrf.mxu0
    %225 = vmatprep.mubr.bf16.mxu0 0
    %226 = vmatmul.mubr.bf16.gmra.mxu0 %v78
    %v227 = vpop.f32.mrf.mxu0
    %v228 = vadd.f32 0.0, %v227
    %v229 = vpop.f32.mrf.mxu0
    %v230 = vpop.f32.mrf.mxu0
    %v231 = vadd.f32 0.0, %v230
    %v232 = vpop.f32.mrf.mxu0
    %233 = vmatprep.mubr.bf16.mxu0 0
    %234 = vmatmul.mubr.bf16.gmra.mxu0 %v79
    %v235 = vpop.f32.mrf.mxu0
    %v236 = vadd.f32 0.0, %v235
    %v237 = vpop.f32.mrf.mxu0
    %v238 = vpop.f32.mrf.mxu0
    %v239 = vadd.f32 0.0, %v238
    %v240 = vpop.f32.mrf.mxu0
    %241 = vmatprep.mubr.bf16.mxu0 0
    %242 = vmatmul.mubr.bf16.gmra.mxu0 %v80
    %v243 = vpop.f32.mrf.mxu0
    %v244 = vadd.f32 0.0, %v243
    %v245 = vpop.f32.mrf.mxu0
    %v246 = vpop.f32.mrf.mxu0
    %v247 = vadd.f32 0.0, %v246
    %v248 = vpop.f32.mrf.mxu0
    %249 = vmatprep.mubr.bf16.mxu0 0
    %250 = vmatmul.mubr.bf16.gmra.mxu0 %v81
    %v251 = vpop.f32.mrf.mxu0
    %v252 = vadd.f32 0.0, %v251
    %v253 = vpop.f32.mrf.mxu0
    %v254 = vpop.f32.mrf.mxu0
    %v255 = vadd.f32 0.0, %v254
    %v256 = vpop.f32.mrf.mxu0
    %257 = vmatprep.mubr.bf16.mxu0 0
    %258 = vmatmul.mubr.bf16.gmra.mxu0 %v82
    %v259 = vpop.f32.mrf.mxu0
    %v260 = vadd.f32 0.0, %v259
    %v261 = vpop.f32.mrf.mxu0
    %v262 = vpop.f32.mrf.mxu0
    %v263 = vadd.f32 0.0, %v262
    %v264 = vpop.f32.mrf.mxu0
    %265 = vmatprep.mubr.bf16.mxu0 0
    %266 = vmatmul.mubr.bf16.gmra.mxu0 %v83
    %v267 = vpop.f32.mrf.mxu0
    %v268 = vadd.f32 0.0, %v267
    %v269 = vpop.f32.mrf.mxu0
    %v270 = vpop.f32.mrf.mxu0
    %v271 = vadd.f32 0.0, %v270
    %v272 = vpop.f32.mrf.mxu0
    %273 = vmatprep.mubr.bf16.mxu0 0
    %274 = vmatmul.mubr.bf16.gmra.mxu0 %v84
    %v275 = vpop.f32.mrf.mxu0
    %v276 = vadd.f32 0.0, %v275
    %v277 = vpop.f32.mrf.mxu0
    %v278 = vpop.f32.mrf.mxu0
    %v279 = vadd.f32 0.0, %v278
    %v280 = vpop.f32.mrf.mxu0
    %281 = vmatprep.mubr.bf16.mxu0 0
    %282 = vmatmul.mubr.bf16.gmra.mxu0 %v85
    %v283 = vpop.f32.mrf.mxu0
    %v284 = vadd.f32 0.0, %v283
    %v285 = vpop.f32.mrf.mxu0
    %v286 = vpop.f32.mrf.mxu0
    %v287 = vadd.f32 0.0, %v286
    %v288 = vpop.f32.mrf.mxu0
    %289 = vmatprep.mubr.bf16.mxu0 0
    %290 = vmatmul.mubr.bf16.gmra.mxu0 %v86
    %v291 = vpop.f32.mrf.mxu0
    %v292 = vadd.f32 0.0, %v291
    %v293 = vpop.f32.mrf.mxu0
    %v294 = vpop.f32.mrf.mxu0
    %v295 = vadd.f32 0.0, %v294
    %v296 = vpop.f32.mrf.mxu0
    %297 = vmatprep.mubr.bf16.mxu0 0
    %298 = vmatmul.mubr.bf16.gmra.mxu0 %v87
    %v299 = vpop.f32.mrf.mxu0
    %v300 = vadd.f32 0.0, %v299
    %v301 = vpop.f32.mrf.mxu0
    %v302 = vpop.f32.mrf.mxu0
    %v303 = vadd.f32 0.0, %v302
    %v304 = vpop.f32.mrf.mxu0
    %305 = vmatprep.mubr.bf16.mxu0 0
    %306 = vmatmul.mubr.bf16.gmra.mxu0 %v88
    %v307 = vpop.f32.mrf.mxu0
    %v308 = vadd.f32 0.0, %v307
    %v309 = vpop.f32.mrf.mxu0
    %v310 = vpop.f32.mrf.mxu0
    %v311 = vadd.f32 0.0, %v310
    %v312 = vpop.f32.mrf.mxu0
    %313 = vdwg.mxu0
    %v314 = vpack.c.bf16 %v191, %v188
    %v315 = vpack.c.bf16 %v199, %v196
    %v316 = vpack.c.bf16 %v207, %v204
    %v317 = vpack.c.bf16 %v215, %v212
    %v318 = vpack.c.bf16 %v223, %v220
    %v319 = vpack.c.bf16 %v231, %v228
    %v320 = vpack.c.bf16 %v239, %v236
    %v321 = vpack.c.bf16 %v247, %v244
    %v322 = vpack.c.bf16 %v255, %v252
    %v323 = vpack.c.bf16 %v263, %v260
    %v324 = vpack.c.bf16 %v271, %v268
    %v325 = vpack.c.bf16 %v279, %v276
    %v326 = vpack.c.bf16 %v287, %v284
    %v327 = vpack.c.bf16 %v295, %v292
    %v328 = vpack.c.bf16 %v303, %v300
    %v329 = vpack.c.bf16 %v311, %v308
    %v346 = vunpack.c.l.b16 %v314
    %v347 = vunpack.c.h.b16 %v314
    %v348 = vunpack.c.l.b16 %v315
    %v349 = vunpack.c.h.b16 %v315
    %v350 = vunpack.c.l.b16 %v316
    %v351 = vunpack.c.h.b16 %v316
    %v352 = vunpack.c.l.b16 %v317
    %v353 = vunpack.c.h.b16 %v317
    %v354 = vunpack.c.l.b16 %v318
    %v355 = vunpack.c.h.b16 %v318
    %v356 = vunpack.c.l.b16 %v319
    %v357 = vunpack.c.h.b16 %v319
    %v358 = vunpack.c.l.b16 %v320
    %v359 = vunpack.c.h.b16 %v320
    %v360 = vunpack.c.l.b16 %v321
    %v361 = vunpack.c.h.b16 %v321
    %v362 = vunpack.c.l.b16 %v322
    %v363 = vunpack.c.h.b16 %v322
    %v364 = vunpack.c.l.b16 %v323
    %v365 = vunpack.c.h.b16 %v323
    %v366 = vunpack.c.l.b16 %v324
    %v367 = vunpack.c.h.b16 %v324
    %v368 = vunpack.c.l.b16 %v325
    %v369 = vunpack.c.h.b16 %v325
    %v370 = vunpack.c.l.b16 %v326
    %v371 = vunpack.c.h.b16 %v326
    %v372 = vunpack.c.l.b16 %v327
    %v373 = vunpack.c.h.b16 %v327
    %v374 = vunpack.c.l.b16 %v328
    %v375 = vunpack.c.h.b16 %v328
    %v376 = vunpack.c.l.b16 %v329
    %v377 = vunpack.c.h.b16 %v329
    %v378 = vpack.c.b16 %v346, %v346
    %v379 = vpack.c.b16 %v347, %v347
    %v380 = vpack.c.b16 %v348, %v348
    %v381 = vpack.c.b16 %v349, %v349
    %v382 = vpack.c.b16 %v350, %v350
    %v383 = vpack.c.b16 %v351, %v351
    %v384 = vpack.c.b16 %v352, %v352
    %v385 = vpack.c.b16 %v353, %v353
    %v386 = vpack.c.b16 %v354, %v354
    %v387 = vpack.c.b16 %v355, %v355
    %v388 = vpack.c.b16 %v356, %v356
    %v389 = vpack.c.b16 %v357, %v357
    %v390 = vpack.c.b16 %v358, %v358
    %v391 = vpack.c.b16 %v359, %v359
    %v392 = vpack.c.b16 %v360, %v360
    %v393 = vpack.c.b16 %v361, %v361
    %v394 = vpack.c.b16 %v362, %v362
    %v395 = vpack.c.b16 %v363, %v363
    %v396 = vpack.c.b16 %v364, %v364
    %v397 = vpack.c.b16 %v365, %v365
    %v398 = vpack.c.b16 %v366, %v366
    %v399 = vpack.c.b16 %v367, %v367
    %v400 = vpack.c.b16 %v368, %v368
    %v401 = vpack.c.b16 %v369, %v369
    %v402 = vpack.c.b16 %v370, %v370
    %v403 = vpack.c.b16 %v371, %v371
    %v404 = vpack.c.b16 %v372, %v372
    %v405 = vpack.c.b16 %v373, %v373
    %v406 = vpack.c.b16 %v374, %v374
    %v407 = vpack.c.b16 %v375, %v375
    %v408 = vpack.c.b16 %v376, %v376
    %v409 = vpack.c.b16 %v377, %v377
    %442 = vst [vmem:[#allocation7] sm:$0xf] %v378
    %443 = vst [vmem:[#allocation7 + $0x4] sm:$0xf] %v379
    %444 = vst [vmem:[#allocation7 + $0x8] sm:$0xf] %v380
    %445 = vst [vmem:[#allocation7 + $0xc] sm:$0xf] %v381
    %446 = vst [vmem:[#allocation7 + $0x10] sm:$0xf] %v382
    %447 = vst [vmem:[#allocation7 + $0x14] sm:$0xf] %v383
    %448 = vst [vmem:[#allocation7 + $0x18] sm:$0xf] %v384
    %449 = vst [vmem:[#allocation7 + $0x1c] sm:$0xf] %v385
    %450 = vst [vmem:[#allocation7 + $0x20] sm:$0xf] %v386
    %451 = vst [vmem:[#allocation7 + $0x24] sm:$0xf] %v387
    %452 = vst [vmem:[#allocation7 + $0x28] sm:$0xf] %v388
    %453 = vst [vmem:[#allocation7 + $0x2c] sm:$0xf] %v389
    %454 = vst [vmem:[#allocation7 + $0x30] sm:$0xf] %v390
    %455 = vst [vmem:[#allocation7 + $0x34] sm:$0xf] %v391
    %456 = vst [vmem:[#allocation7 + $0x38] sm:$0xf] %v392
    %457 = vst [vmem:[#allocation7 + $0x3c] sm:$0xf] %v393
    %458 = vst [vmem:[#allocation7 + $0x40] sm:$0xf] %v394
    %459 = vst [vmem:[#allocation7 + $0x44] sm:$0xf] %v395
    %460 = vst [vmem:[#allocation7 + $0x48] sm:$0xf] %v396
    %461 = vst [vmem:[#allocation7 + $0x4c] sm:$0xf] %v397
    %462 = vst [vmem:[#allocation7 + $0x50] sm:$0xf] %v398
    %463 = vst [vmem:[#allocation7 + $0x54] sm:$0xf] %v399
    %464 = vst [vmem:[#allocation7 + $0x58] sm:$0xf] %v400
    %465 = vst [vmem:[#allocation7 + $0x5c] sm:$0xf] %v401
    %466 = vst [vmem:[#allocation7 + $0x60] sm:$0xf] %v402
    %467 = vst [vmem:[#allocation7 + $0x64] sm:$0xf] %v403
    %468 = vst [vmem:[#allocation7 + $0x68] sm:$0xf] %v404
    %469 = vst [vmem:[#allocation7 + $0x6c] sm:$0xf] %v405
    %470 = vst [vmem:[#allocation7 + $0x70] sm:$0xf] %v406
    %471 = vst [vmem:[#allocation7 + $0x74] sm:$0xf] %v407
    %472 = vst [vmem:[#allocation7 + $0x78] sm:$0xf] %v408
    %473 = vst [vmem:[#allocation7 + $0x7c] sm:$0xf] %v409
    // Predicated region
    $region18: #{tpu_custom_call.1} parent=1 // pred_check
      _
    $region19: #{tpu_custom_call.1} parent=1 // pred_check_branch
      %475 = sbr.rel (0) target = $region21
    $region20: #{tpu_custom_call.1} parent=1 // pred_region
      %s477 = ssub.s32 2048, 2048
      %478 = vsyncadd [#allocation4], %s477
      %s479 = sshll.u32 [#allocation7], 4
      %s480 = int_to_ptr.vmem [resolvable:$true] %s479
      %485 = dma.vmem_to_hbm [thread:$0]  %s480, 2048, %s2, [#allocation4], 64, 64, 4
    $region21: #{tpu_custom_call.1} parent=1 // pred_fallthru
      _
    // Predicated region
    $region22: #{tpu_custom_call.1} parent=1 // pred_check
      _
    $region23: #{tpu_custom_call.1} parent=1 // pred_check_branch
      %487 = sbr.rel (0) target = $region25
    $region24: #{tpu_custom_call.1} parent=1 // pred_region
      %488 = dma.done [#allocation4], 2048
    $region25: #{tpu_custom_call.1} parent=1 // pred_fallthru
      _
    %489 = vsyncpa [#allocation3], 1
    %490 = vsyncpa [#allocation6], 1
    %491 = vsyncpa [#allocation4], 1

</llo_original>
